<compile_context>
chip_gen: v7x
topology: tpu7x:2x2x1
jax: 0.10.0
libtpu: 0.0.40
codegen_flags: <defaults>
</compile_context>

<pallas_src>
import functools

import jax
import jax.numpy as jnp
from jax.experimental import pallas as pl
from jax.experimental.pallas import tpu as pltpu

BN_EPS = 1e-5


def _cdiv(a, b):
    return -(-a // b)


def _round_up(x, m):
    return _cdiv(x, m) * m


def _softplus(x):
    return jnp.maximum(x, 0.0) + jnp.log1p(jnp.exp(-jnp.abs(x)))


def _sigmoid(x, *, approx=False):
    # Single-exp logistic: exp(-|x|) is in (0, 1] (never overflows), the reciprocal
    # argument is in [1, 2] (safe for the approx EUP path), no NaN in any branch.
    ex = jnp.exp(-jnp.abs(x))
    r = pl.reciprocal(1.0 + ex, approx=approx)
    return jnp.where(x >= 0.0, r, ex * r)


# ---------------------------------------------------------------------------
# Kernel 1: fused inference-network + topic prologue (single block, all in VMEM)
#   doc -> softplus linears -> (mu, log_var) -> reparameterize -> softmax
#       -> sigmoid(topic matmul) -> embedded = cat(topic_info, doc)
# ---------------------------------------------------------------------------
def _prologue_kernel(*refs, num_hidden, topic_dim):
    doc_ref, eps_ref, adapt_w, adapt_b = refs[:4]
    rest = refs[4:]
    hid = rest[:2 * num_hidden]
    f_mu_w, f_mu_b, f_sg_w, f_sg_b, topic_w, o_ref = rest[2 * num_hidden:]

    doc = doc_ref[...]
    h = _softplus(jnp.dot(doc, adapt_w[...], preferred_element_type=jnp.float32)
                  + adapt_b[...])
    for i in range(num_hidden):
        h = _softplus(jnp.dot(h, hid[2 * i][...],
                              preferred_element_type=jnp.float32)
                      + hid[2 * i + 1][...])
    # dropout is identity in eval mode
    mu = jnp.dot(h, f_mu_w[...], preferred_element_type=jnp.float32) + f_mu_b[...]
    log_var = jnp.dot(h, f_sg_w[...], preferred_element_type=jnp.float32) + f_sg_b[...]
    # reparameterize: z = mu + eps * exp(0.5 * log_var)   (matches the torch forward)
    z = mu + eps_ref[...] * jnp.exp(0.5 * log_var)
    # topic_prob = softmax(z, axis=1)
    z = z - jnp.max(z, axis=1, keepdims=True)
    e = jnp.exp(z)
    p = e * pl.reciprocal(jnp.sum(e, axis=1, keepdims=True))
    # topic_info = sigmoid(topic_prob @ topic_embedding)          (B, 128)
    ti = _sigmoid(jnp.dot(p, topic_w[...], preferred_element_type=jnp.float32))
    # embedded = cat((topic_info, doc_embs), dim=1), stored in the head's dtype
    o_ref[:, :topic_dim] = ti.astype(o_ref.dtype)
    o_ref[:, topic_dim:] = doc.astype(o_ref.dtype)


def pallas_prologue(doc_embs, eps, params, embed_dtype):
    B, C = doc_embs.shape
    topic_dim = params["topic_embedding"].shape[1]         # 128
    args = [doc_embs, eps, params["adapt_w"], params["adapt_b"]]
    for w, b in params["hidden"]:
        args += [w, b]
    args += [params["f_mu_w"], params["f_mu_b"],
             params["f_sigma_w"], params["f_sigma_b"],
             params["topic_embedding"]]
    return pl.pallas_call(
        functools.partial(_prologue_kernel,
                          num_hidden=len(params["hidden"]),
                          topic_dim=topic_dim),
        out_shape=jax.ShapeDtypeStruct((B, topic_dim + C), embed_dtype),
    )(*args)


# ---------------------------------------------------------------------------
# Kernel 2: vocabulary head, tiled over bow_size.
#   word_dists = sigmoid((embedded @ W') * col_scale + bias')
# W' is bf16 or int8 (col_scale folds the dequant), BN already folded into W'/bias'.
# ---------------------------------------------------------------------------
def _head_kernel(x_ref, w_ref, scale_ref, b_ref, o_ref):
    w = w_ref[...].astype(x_ref.dtype)        # identity for bf16, dequant-cast for int8
    y = jnp.dot(x_ref[...], w, preferred_element_type=jnp.float32)
    y = y * scale_ref[...] + b_ref[...]       # (1, tile_n) broadcasts over batch
    o_ref[...] = _sigmoid(y, approx=True).astype(o_ref.dtype)


def pallas_head(embedded, w_comb, w_scale, bias_comb, *, tile_n):
    B, Kdim = embedded.shape
    V_pad = w_comb.shape[1]
    assert V_pad % tile_n == 0
    w_bytes = jnp.dtype(w_comb.dtype).itemsize
    x_bytes = jnp.dtype(embedded.dtype).itemsize

    # Explicit VMEM budget: double-buffered weight tile + in-kernel cast temp +
    # double-buffered f32 output tile + resident x + bias/scale + slack.  Passing it
    # explicitly avoids tripping v5e's 16 MiB scoped default at large tiles while
    # staying well under v7x's 64 MiB physical per-TC VMEM.
    vmem_need = (2 * Kdim * tile_n * w_bytes
                 + Kdim * tile_n * 2
                 + 2 * B * tile_n * 4
                 + 2 * B * Kdim * x_bytes
                 + 4 * tile_n * 4
                 + (2 << 20))
    vmem_limit = int(min(max(vmem_need, 16 << 20), 48 << 20))

    cost = pl.CostEstimate(
        flops=2 * B * Kdim * V_pad,
        transcendentals=B * V_pad,
        bytes_accessed=(Kdim * V_pad * w_bytes + B * V_pad * 4
                        + B * Kdim * x_bytes + 2 * V_pad * 4),
    )
    # NOTE: output kept f32 (B is tiny here); switch to bf16 if batch grows so the
    # write stream stops competing with the weight read.
    return pl.pallas_call(
        _head_kernel,
        out_shape=jax.ShapeDtypeStruct((B, V_pad), jnp.float32),
        grid=(V_pad // tile_n,),
        in_specs=[
            pl.BlockSpec((B, Kdim), lambda j: (0, 0)),       # embedded (resident)
            pl.BlockSpec((Kdim, tile_n), lambda j: (0, j)),  # folded word embedding
            pl.BlockSpec((1, tile_n), lambda j: (0, j)),     # per-column dequant scale
            pl.BlockSpec((1, tile_n), lambda j: (0, j)),     # folded BN bias
        ],
        out_specs=pl.BlockSpec((B, tile_n), lambda j: (0, j)),
        compiler_params=pltpu.CompilerParams(
            dimension_semantics=("parallel",),
            vmem_limit_bytes=vmem_limit),
        cost_estimate=cost,
    )(embedded, w_comb, w_scale, bias_comb)


# ---------------------------------------------------------------------------
# Vocab tiling policy
# ---------------------------------------------------------------------------
def _default_desired_tile():
    # v5e: ~0.8 TB/s HBM (2048 already amortizes the ~0.35us/step cost) and a small
    # scoped-VMEM default; v6e/v7x: 4096 (double-buffered bf16 weight tile ~14.7 MiB).
    try:
        kind = jax.devices()[0].device_kind.lower()
    except Exception:
        return 2048
    return 2048 if "v5" in kind else 4096


def _choose_head_tiling(V, desired_tile):
    """Pick (tile_n, V_pad): lane-dense tiles near desired_tile, padding waste bounded
    by ~128 columns per tile (never rounds V up to a multiple of tile_n), and >=2 tiles
    whenever possible so the 'parallel' vocab axis feeds both v7x TensorCores."""
    V128 = _round_up(V, 128)
    if V128 <= 128:
        return 128, 128
    num_tiles = max(_cdiv(V128, desired_tile), 2)
    tile_n = _round_up(_cdiv(V128, num_tiles), 128)
    return tile_n, tile_n * num_tiles


# ---------------------------------------------------------------------------
# Parameter construction (shapes match the module's __init__) + one-time
# eval-mode preparation (BN folding, weight concat / pad / cast / quant).
# ---------------------------------------------------------------------------
def init_params(key, bow_size, contextual_size, n_components, hidden_sizes):
    keys = jax.random.split(key, 16)

    def dense(k, fan_in, fan_out, scale=0.1):
        kw, kb = jax.random.split(k)
        w = scale * jax.random.normal(kw, (fan_in, fan_out), jnp.float32)
        b = scale * jax.random.normal(kb, (1, fan_out), jnp.float32)
        return w, b

    params = {}
    # ContextualInferenceNetwork: adapt_bert + hidden stack (softplus activation)
    params["adapt_w"], params["adapt_b"] = dense(keys[0], contextual_size,
                                                 hidden_sizes[0])
    params["hidden"] = [dense(keys[1 + i], hidden_sizes[i], hidden_sizes[i + 1])
                        for i in range(len(hidden_sizes) - 1)]
    params["f_mu_w"], params["f_mu_b"] = dense(keys[5], hidden_sizes[-1], n_components)
    params["f_sigma_w"], params["f_sigma_b"] = dense(keys[6], hidden_sizes[-1],
                                                     n_components)
    # affine-free BatchNorm1d(n_components) running stats (init defaults; a trained
    # checkpoint would supply its real running_mean / running_var here).
    params["f_mu_bn_mean"] = jnp.zeros((1, n_components), jnp.float32)
    params["f_mu_bn_var"] = jnp.ones((1, n_components), jnp.float32)
    params["f_sigma_bn_mean"] = jnp.zeros((1, n_components), jnp.float32)
    params["f_sigma_bn_var"] = jnp.ones((1, n_components), jnp.float32)

    # topic_embedding: Parameter(torch.randn(n_components, 128))
    params["topic_embedding"] = jax.random.normal(
        keys[7], (n_components, 128), jnp.float32)
    # word_embedding: Parameter(torch.randn(128 + 768, bow_size))
    params["word_embedding"] = jax.random.normal(
        keys[8], (128 + contextual_size, bow_size), jnp.float32)
    # outer BatchNorm1d(bow_size): torch defaults (gamma=1, beta=0, rm=0, rv=1)
    params["bn_gamma"] = jnp.ones((1, bow_size), jnp.float32)
    params["bn_beta"] = jnp.zeros((1, bow_size), jnp.float32)
    params["bn_mean"] = jnp.zeros((1, bow_size), jnp.float32)
    params["bn_var"] = jnp.ones((1, bow_size), jnp.float32)
    return params


def prepare_inference_params(params, *, tile_n=None, embed_dtype=jnp.bfloat16,
                             weight_format="bf16"):
    """One-time eval transform: fold BatchNorms, pad / cast / quantize the word
    embedding, choose the vocab tiling.  weight_format: "bf16" or "int8" (int8 keeps a
    per-output-column f32 dequant scale applied to the accumulator in-kernel)."""
    p = dict(params)

    def fold_affine_free_bn(w, b, rm, rv):
        s = 1.0 / jnp.sqrt(rv + BN_EPS)
        return w * s, (b - rm) * s

    p["f_mu_w"], p["f_mu_b"] = fold_affine_free_bn(
        params["f_mu_w"], params["f_mu_b"],
        params["f_mu_bn_mean"], params["f_mu_bn_var"])
    p["f_sigma_w"], p["f_sigma_b"] = fold_affine_free_bn(
        params["f_sigma_w"], params["f_sigma_b"],
        params["f_sigma_bn_mean"], params["f_sigma_bn_var"])

    # Fold the outer eval-mode BatchNorm1d(bow_size) into the word embedding:
    #   bn(x @ W) = x @ (W * scale) + (beta - rm * scale),  scale = gamma/sqrt(rv+eps)
    scale = params["bn_gamma"] / jnp.sqrt(params["bn_var"] + BN_EPS)   # (1, V)
    w_comb = params["word_embedding"] * scale                          # (896, V) f32
    bias_comb = params["bn_beta"] - params["bn_mean"] * scale          # (1, V)

    V = w_comb.shape[1]
    desired = int(tile_n) if tile_n is not None else _default_desired_tile()
    tile_sel, V_pad = _choose_head_tiling(V, desired)
    if V_pad != V:
        w_comb = jnp.pad(w_comb, ((0, 0), (0, V_pad - V)))
        bias_comb = jnp.pad(bias_comb, ((0, 0), (0, V_pad - V)))

    if weight_format == "int8":
        # Halve the dominant HBM weight stream (v5e/v6e; fp8 is the v7x analog).
        amax = jnp.max(jnp.abs(w_comb), axis=0, keepdims=True)          # (1, V_pad)
        w_scale = jnp.maximum(amax, 1e-12) / 127.0
        w_q = jnp.clip(jnp.round(w_comb / w_scale), -127.0, 127.0).astype(jnp.int8)
        p["w_comb"] = w_q
        p["w_scale"] = w_scale.astype(jnp.float32)
        # TODO(synk): on v7x the same trick should use fp8 (e4m3) weights; the MXU
        # there has no int path.
    else:
        p["w_comb"] = w_comb.astype(embed_dtype)       # dominant HBM stream -> bf16
        p["w_scale"] = jnp.ones((1, V_pad), jnp.float32)

    p["bias_comb"] = bias_comb.astype(jnp.float32)
    p["tile_n"] = tile_sel
    p["bow_size"] = int(V)
    p["embed_dtype"] = embed_dtype
    p["weight_format"] = weight_format
    return p


def ztm_topic_embed_forward(infer_params, target, doc_embs, noise_key):
    """Eval-mode forward (is_train=False): returns word_dists of shape (B, bow_size)."""
    # `target` (BoW) only feeds the training loss; the zeroshot inference network
    # consumes doc_embs (contextual embeddings) only.
    del target
    n_components = infer_params["f_mu_w"].shape[1]
    # reparameterize noise (torch.randn_like), deterministic key here
    eps = jax.random.normal(noise_key, (doc_embs.shape[0], n_components), jnp.float32)
    embedded = pallas_prologue(doc_embs, eps, infer_params,
                               infer_params["embed_dtype"])
    word_dists = pallas_head(embedded, infer_params["w_comb"],
                             infer_params["w_scale"], infer_params["bias_comb"],
                             tile_n=infer_params["tile_n"])
    return word_dists[:, :infer_params["bow_size"]]


# ---------------------------------------------------------------------------
# Pure-JAX reference (same eval-mode folding / casts) for correctness checking.
# ---------------------------------------------------------------------------
def reference_forward(p, doc_embs, eps):
    h = jax.nn.softplus(doc_embs @ p["adapt_w"] + p["adapt_b"])
    for w, b in p["hidden"]:
        h = jax.nn.softplus(h @ w + b)
    mu = h @ p["f_mu_w"] + p["f_mu_b"]
    log_var = h @ p["f_sigma_w"] + p["f_sigma_b"]
    z = mu + eps * jnp.exp(0.5 * log_var)
    prob = jax.nn.softmax(z, axis=1)
    ti = jax.nn.sigmoid(prob @ p["topic_embedding"])
    emb = jnp.concatenate([ti, doc_embs], axis=1).astype(p["embed_dtype"])
    w = p["w_comb"].astype(p["embed_dtype"])
    y = jnp.dot(emb, w, preferred_element_type=jnp.float32)
    y = y * p["w_scale"] + p["bias_comb"]
    return jax.nn.sigmoid(y)[:, :p["bow_size"]]


if __name__ == "__main__":
    bow_size = 256
    contextual_size = 768   # fixed by word_embedding shape (128 + 768, bow_size)
    n_components = 16
    hidden_sizes = (64, 64)
    B = 8

    root = jax.random.PRNGKey(0)
    k_param, k_doc, k_tgt, k_noise = jax.random.split(root, 4)
    raw_params = init_params(k_param, bow_size, contextual_size, n_components,
                             hidden_sizes)
    doc_embs = jax.random.normal(k_doc, (B, contextual_size), jnp.float32)
    target = jax.random.uniform(k_tgt, (B, bow_size), jnp.float32)  # unused in eval fwd

    # --- bf16-weight path (default) -------------------------------------------------
    params = prepare_inference_params(raw_params, embed_dtype=jnp.bfloat16,
                                      weight_format="bf16")
    word_dists = ztm_topic_embed_forward(params, target, doc_embs, k_noise)
    word_dists = jax.block_until_ready(word_dists)
    assert word_dists.shape == (B, bow_size)
    assert bool(jnp.all(jnp.isfinite(word_dists)))
    assert bool(jnp.all((word_dists >= 0.0) & (word_dists <= 1.0)))  # sigmoid output

    eps = jax.random.normal(k_noise, (B, n_components), jnp.float32)
    ref = reference_forward(params, doc_embs, eps)
    max_err = float(jnp.max(jnp.abs(word_dists - ref)))
    assert max_err < 2e-2, f"bf16 path deviates from reference: {max_err}"

    # --- int8-weight path (halves the dominant HBM weight stream) --------------------
    params_i8 = prepare_inference_params(raw_params, embed_dtype=jnp.bfloat16,
                                         weight_format="int8")
    word_dists_i8 = ztm_topic_embed_forward(params_i8, target, doc_embs, k_noise)
    word_dists_i8 = jax.block_until_ready(word_dists_i8)
    assert word_dists_i8.shape == (B, bow_size)
    assert bool(jnp.all(jnp.isfinite(word_dists_i8)))
    assert bool(jnp.all((word_dists_i8 >= 0.0) & (word_dists_i8 <= 1.0)))
    mean_err = float(jnp.mean(jnp.abs(word_dists_i8 - word_dists)))
    assert mean_err < 5e-2, f"int8 path deviates too much from bf16: {mean_err}"

    print("KERNEL_OK")
</pallas_src>

<mosaic_0001>
module attributes {stable_mosaic.version = 11 : i64} {
  func.func @_prologue_kernel(%arg0: memref<8x768xf32, #tpu.memory_space<vmem>>, %arg1: memref<8x16xf32, #tpu.memory_space<vmem>>, %arg2: memref<768x64xf32, #tpu.memory_space<vmem>>, %arg3: memref<1x64xf32, #tpu.memory_space<vmem>>, %arg4: memref<64x64xf32, #tpu.memory_space<vmem>>, %arg5: memref<1x64xf32, #tpu.memory_space<vmem>>, %arg6: memref<64x16xf32, #tpu.memory_space<vmem>>, %arg7: memref<1x16xf32, #tpu.memory_space<vmem>>, %arg8: memref<64x16xf32, #tpu.memory_space<vmem>>, %arg9: memref<1x16xf32, #tpu.memory_space<vmem>>, %arg10: memref<16x128xf32, #tpu.memory_space<vmem>>, %arg11: memref<8x896xbf16, #tpu.memory_space<vmem>>) attributes {dimension_semantics = [], scalar_prefetch = 0 : i64, scratch_operands = 0 : i64, tpu.core_type = #tpu.core_type<tc>} {
    %c0 = arith.constant 0 : index
    %c0_0 = arith.constant 0 : index
    %0 = vector.load %arg0[%c0, %c0_0] : memref<8x768xf32, #tpu.memory_space<vmem>>, vector<8x768xf32>
    %c0_1 = arith.constant 0 : index
    %c0_2 = arith.constant 0 : index
    %1 = vector.load %arg2[%c0_1, %c0_2] : memref<768x64xf32, #tpu.memory_space<vmem>>, vector<768x64xf32>
    %cst = arith.constant dense<0.000000e+00> : vector<8x64xf32>
    %2 = tpu.matmul %0, %1, %cst {dimension_numbers = #tpu.dot_dimension_numbers<[1], [0], [0], [1], [0, 0, 1, 1], [], []>} : vector<8x768xf32>, vector<768x64xf32>, vector<8x64xf32> -> vector<8x64xf32>
    %c0_3 = arith.constant 0 : index
    %c0_4 = arith.constant 0 : index
    %3 = vector.load %arg3[%c0_3, %c0_4] : memref<1x64xf32, #tpu.memory_space<vmem>>, vector<1x64xf32>
    %4 = vector.broadcast %3 : vector<1x64xf32> to vector<8x64xf32>
    %5 = arith.addf %2, %4 : vector<8x64xf32>
    %cst_5 = arith.constant 0.000000e+00 : f32
    %6 = vector.broadcast %cst_5 : f32 to vector<8x64xf32>
    %7 = arith.maximumf %5, %6 : vector<8x64xf32>
    %8 = math.absf %5 : vector<8x64xf32>
    %cst_6 = arith.constant 0.000000e+00 : f32
    %9 = vector.broadcast %cst_6 : f32 to vector<8x64xf32>
    %10 = arith.subf %9, %8 : vector<8x64xf32>
    %11 = math.exp %10 : vector<8x64xf32>
    %12 = math.log1p %11 : vector<8x64xf32>
    %13 = arith.addf %7, %12 : vector<8x64xf32>
    %c0_7 = arith.constant 0 : index
    %c0_8 = arith.constant 0 : index
    %14 = vector.load %arg4[%c0_7, %c0_8] : memref<64x64xf32, #tpu.memory_space<vmem>>, vector<64x64xf32>
    %cst_9 = arith.constant dense<0.000000e+00> : vector<8x64xf32>
    %15 = tpu.matmul %13, %14, %cst_9 {dimension_numbers = #tpu.dot_dimension_numbers<[1], [0], [0], [1], [0, 0, 1, 1], [], []>} : vector<8x64xf32>, vector<64x64xf32>, vector<8x64xf32> -> vector<8x64xf32>
    %c0_10 = arith.constant 0 : index
    %c0_11 = arith.constant 0 : index
    %16 = vector.load %arg5[%c0_10, %c0_11] : memref<1x64xf32, #tpu.memory_space<vmem>>, vector<1x64xf32>
    %17 = vector.broadcast %16 : vector<1x64xf32> to vector<8x64xf32>
    %18 = arith.addf %15, %17 : vector<8x64xf32>
    %cst_12 = arith.constant 0.000000e+00 : f32
    %19 = vector.broadcast %cst_12 : f32 to vector<8x64xf32>
    %20 = arith.maximumf %18, %19 : vector<8x64xf32>
    %21 = math.absf %18 : vector<8x64xf32>
    %cst_13 = arith.constant 0.000000e+00 : f32
    %22 = vector.broadcast %cst_13 : f32 to vector<8x64xf32>
    %23 = arith.subf %22, %21 : vector<8x64xf32>
    %24 = math.exp %23 : vector<8x64xf32>
    %25 = math.log1p %24 : vector<8x64xf32>
    %26 = arith.addf %20, %25 : vector<8x64xf32>
    %c0_14 = arith.constant 0 : index
    %c0_15 = arith.constant 0 : index
    %27 = vector.load %arg6[%c0_14, %c0_15] : memref<64x16xf32, #tpu.memory_space<vmem>>, vector<64x16xf32>
    %cst_16 = arith.constant dense<0.000000e+00> : vector<8x16xf32>
    %28 = tpu.matmul %26, %27, %cst_16 {dimension_numbers = #tpu.dot_dimension_numbers<[1], [0], [0], [1], [0, 0, 1, 1], [], []>} : vector<8x64xf32>, vector<64x16xf32>, vector<8x16xf32> -> vector<8x16xf32>
    %c0_17 = arith.constant 0 : index
    %c0_18 = arith.constant 0 : index
    %29 = vector.load %arg7[%c0_17, %c0_18] : memref<1x16xf32, #tpu.memory_space<vmem>>, vector<1x16xf32>
    %30 = vector.broadcast %29 : vector<1x16xf32> to vector<8x16xf32>
    %31 = arith.addf %28, %30 : vector<8x16xf32>
    %c0_19 = arith.constant 0 : index
    %c0_20 = arith.constant 0 : index
    %32 = vector.load %arg8[%c0_19, %c0_20] : memref<64x16xf32, #tpu.memory_space<vmem>>, vector<64x16xf32>
    %cst_21 = arith.constant dense<0.000000e+00> : vector<8x16xf32>
    %33 = tpu.matmul %26, %32, %cst_21 {dimension_numbers = #tpu.dot_dimension_numbers<[1], [0], [0], [1], [0, 0, 1, 1], [], []>} : vector<8x64xf32>, vector<64x16xf32>, vector<8x16xf32> -> vector<8x16xf32>
    %c0_22 = arith.constant 0 : index
    %c0_23 = arith.constant 0 : index
    %34 = vector.load %arg9[%c0_22, %c0_23] : memref<1x16xf32, #tpu.memory_space<vmem>>, vector<1x16xf32>
    %35 = vector.broadcast %34 : vector<1x16xf32> to vector<8x16xf32>
    %36 = arith.addf %33, %35 : vector<8x16xf32>
    %c0_24 = arith.constant 0 : index
    %c0_25 = arith.constant 0 : index
    %37 = vector.load %arg1[%c0_24, %c0_25] : memref<8x16xf32, #tpu.memory_space<vmem>>, vector<8x16xf32>
    %cst_26 = arith.constant 5.000000e-01 : f32
    %38 = vector.broadcast %cst_26 : f32 to vector<8x16xf32>
    %39 = arith.mulf %38, %36 : vector<8x16xf32>
    %40 = math.exp %39 : vector<8x16xf32>
    %41 = arith.mulf %37, %40 : vector<8x16xf32>
    %42 = arith.addf %31, %41 : vector<8x16xf32>
    %cst_27 = arith.constant dense<0xFF800000> : vector<8xf32>
    %43 = vector.multi_reduction <maximumf>, %42, %cst_27 [1] : vector<8x16xf32> to vector<8xf32>
    %44 = vector.shape_cast %43 : vector<8xf32> to vector<8x1xf32>
    %45 = vector.broadcast %44 : vector<8x1xf32> to vector<8x16xf32>
    %46 = arith.subf %42, %45 : vector<8x16xf32>
    %47 = math.exp %46 : vector<8x16xf32>
    %cst_28 = arith.constant dense<0.000000e+00> : vector<8xf32>
    %48 = vector.multi_reduction <add>, %47, %cst_28 [1] : vector<8x16xf32> to vector<8xf32>
    %49 = vector.shape_cast %48 : vector<8xf32> to vector<8x1xf32>
    %50 = tpu.reciprocal %49 : vector<8x1xf32> -> vector<8x1xf32>
    %51 = vector.broadcast %50 : vector<8x1xf32> to vector<8x16xf32>
    %52 = arith.mulf %47, %51 : vector<8x16xf32>
    %c0_29 = arith.constant 0 : index
    %c0_30 = arith.constant 0 : index
    %53 = vector.load %arg10[%c0_29, %c0_30] : memref<16x128xf32, #tpu.memory_space<vmem>>, vector<16x128xf32>
    %cst_31 = arith.constant dense<0.000000e+00> : vector<8x128xf32>
    %54 = tpu.matmul %52, %53, %cst_31 {dimension_numbers = #tpu.dot_dimension_numbers<[1], [0], [0], [1], [0, 0, 1, 1], [], []>} : vector<8x16xf32>, vector<16x128xf32>, vector<8x128xf32> -> vector<8x128xf32>
    %55 = math.absf %54 : vector<8x128xf32>
    %cst_32 = arith.constant 0.000000e+00 : f32
    %56 = vector.broadcast %cst_32 : f32 to vector<8x128xf32>
    %57 = arith.subf %56, %55 : vector<8x128xf32>
    %58 = math.exp %57 : vector<8x128xf32>
    %cst_33 = arith.constant 1.000000e+00 : f32
    %59 = vector.broadcast %cst_33 : f32 to vector<8x128xf32>
    %60 = arith.addf %59, %58 : vector<8x128xf32>
    %61 = tpu.reciprocal %60 : vector<8x128xf32> -> vector<8x128xf32>
    %cst_34 = arith.constant 0.000000e+00 : f32
    %62 = vector.broadcast %cst_34 : f32 to vector<8x128xf32>
    %63 = arith.cmpf oge, %54, %62 : vector<8x128xf32>
    %64 = arith.mulf %58, %61 : vector<8x128xf32>
    %65 = arith.select %63, %61, %64 : vector<8x128xi1>, vector<8x128xf32>
    %66 = arith.truncf %65 : vector<8x128xf32> to vector<8x128xbf16>
    %c0_35 = arith.constant 0 : index
    %c0_36 = arith.constant 0 : index
    %67 = vector.load %arg11[%c0_35, %c0_36] : memref<8x896xbf16, #tpu.memory_space<vmem>>, vector<8x128xbf16>
    tpu.vector_store %arg11[%c0_35, %c0_36], %66 {strides = array<i32>} : memref<8x896xbf16, #tpu.memory_space<vmem>>, vector<8x128xbf16>,
    %68 = arith.truncf %0 : vector<8x768xf32> to vector<8x768xbf16>
    %c0_37 = arith.constant 0 : index
    %c128 = arith.constant 128 : index
    %69 = vector.load %arg11[%c0_37, %c128] : memref<8x896xbf16, #tpu.memory_space<vmem>>, vector<8x768xbf16>
    tpu.vector_store %arg11[%c0_37, %c128], %68 {strides = array<i32>} : memref<8x896xbf16, #tpu.memory_space<vmem>>, vector<8x768xbf16>,
    return
  }
}

</mosaic_0001>

<llo_original>
// kernel: tpu_custom_call.1
$region0: #{tpu_custom_call.1}
  #allocation0 [shape = 'u32[]', space=smem, size = 0x4, offset = 0x4, fixed_abs, tag = 'smem constant byte address 0x4 - core index']
  #allocation1 [shape = 'u32[144,128]{1,0:T(1,128)}', space=vmem, size = 0x12000, scoped, tag = 'internal scratch']
  %s0 = inlined_call_operand.vmem [shape: f32[8,768], index: 0, kind: input, shape index: {}]
  %s1 = inlined_call_operand.vmem [shape: f32[8,16], index: 1, kind: input, shape index: {}]
  %s2 = inlined_call_operand.vmem [shape: f32[768,64], index: 2, kind: input, shape index: {}]
  %s3 = inlined_call_operand.vmem [shape: f32[1,64], index: 3, kind: input, shape index: {}]
  %s4 = inlined_call_operand.vmem [shape: f32[64,64], index: 4, kind: input, shape index: {}]
  %s5 = inlined_call_operand.vmem [shape: f32[1,64], index: 5, kind: input, shape index: {}]
  %s6 = inlined_call_operand.vmem [shape: f32[64,16], index: 6, kind: input, shape index: {}]
  %s7 = inlined_call_operand.vmem [shape: f32[1,16], index: 7, kind: input, shape index: {}]
  %s8 = inlined_call_operand.vmem [shape: f32[64,16], index: 8, kind: input, shape index: {}]
  %s9 = inlined_call_operand.vmem [shape: f32[1,16], index: 9, kind: input, shape index: {}]
  %s10 = inlined_call_operand.vmem [shape: f32[16,128], index: 10, kind: input, shape index: {}]
  %s11 = inlined_call_operand.hbm [shape: bf16[8,896], index: 11, kind: output, shape index: {}]
  %s12 = sld [smem:[#allocation0]]
  $region54: #{tpu_custom_call.1} parent=0
    _
  %s14 = ssub.s32 1, %s12
  %s15 = scalar_select 0, %s14, %s12
  $region1: #{tpu_custom_call.1} parent=0
    #allocation2 [shape = 'u8[14336]{0}', space=vmem, size = 0x3800, scoped, tag = 'output window, operand 0, single buffered']
    #allocation3 [shape = 's32[1]{0}', space=sflag, size = 0x4, scoped, tag = 'scoped memory for tpu_custom_call.1']
    %16 = vsyncpa [#allocation3], 0
    // Predicated region
    $region2: #{tpu_custom_call.1} parent=1 // pred_check
      _
    $region3: #{tpu_custom_call.1} parent=1 // pred_check_branch
      %18 = sbr.rel (0) target = $region5
    $region4: #{tpu_custom_call.1} parent=1 // pred_region
      _
    $region5: #{tpu_custom_call.1} parent=1 // pred_fallthru
      _
    // Predicated region
    $region6: #{tpu_custom_call.1} parent=1 // pred_check
      _
    $region7: #{tpu_custom_call.1} parent=1 // pred_check_branch
      %20 = sbr.rel (0) target = $region9
    $region8: #{tpu_custom_call.1} parent=1 // pred_region
      _
    $region9: #{tpu_custom_call.1} parent=1 // pred_fallthru
      _
    // Predicated region
    $region10: #{tpu_custom_call.1} parent=1 // pred_check
      _
    $region11: #{tpu_custom_call.1} parent=1 // pred_check_branch
      %22 = sbr.rel (0) target = $region13
    $region12: #{tpu_custom_call.1} parent=1 // pred_region
      _
    $region13: #{tpu_custom_call.1} parent=1 // pred_fallthru
      _
    // Predicated region
    $region14: #{tpu_custom_call.1} parent=1 // pred_check
      _
    $region15: #{tpu_custom_call.1} parent=1 // pred_check_branch
      %24 = sbr.rel (0) target = $region17
    $region16: #{tpu_custom_call.1} parent=1 // pred_region
      _
    $region17: #{tpu_custom_call.1} parent=1 // pred_fallthru
      _
    // Predicated region
    $region18: #{tpu_custom_call.1} parent=1 // pred_check
      _
    $region19: #{tpu_custom_call.1} parent=1 // pred_check_branch
      %26 = sbr.rel (0) target = $region21
    $region20: #{tpu_custom_call.1} parent=1 // pred_region
      _
    $region21: #{tpu_custom_call.1} parent=1 // pred_fallthru
      _
    // Predicated region
    $region22: #{tpu_custom_call.1} parent=1 // pred_check
      _
    $region23: #{tpu_custom_call.1} parent=1 // pred_check_branch
      %28 = sbr.rel (0) target = $region25
    $region24: #{tpu_custom_call.1} parent=1 // pred_region
      _
    $region25: #{tpu_custom_call.1} parent=1 // pred_fallthru
      _
    // Predicated region
    $region26: #{tpu_custom_call.1} parent=1 // pred_check
      _
    $region27: #{tpu_custom_call.1} parent=1 // pred_check_branch
      %30 = sbr.rel (0) target = $region29
    $region28: #{tpu_custom_call.1} parent=1 // pred_region
      _
    $region29: #{tpu_custom_call.1} parent=1 // pred_fallthru
      _
    // Predicated region
    $region30: #{tpu_custom_call.1} parent=1 // pred_check
      _
    $region31: #{tpu_custom_call.1} parent=1 // pred_check_branch
      %32 = sbr.rel (0) target = $region33
    $region32: #{tpu_custom_call.1} parent=1 // pred_region
      _
    $region33: #{tpu_custom_call.1} parent=1 // pred_fallthru
      _
    // Predicated region
    $region34: #{tpu_custom_call.1} parent=1 // pred_check
      _
    $region35: #{tpu_custom_call.1} parent=1 // pred_check_branch
      %34 = sbr.rel (0) target = $region37
    $region36: #{tpu_custom_call.1} parent=1 // pred_region
      _
    $region37: #{tpu_custom_call.1} parent=1 // pred_fallthru
      _
    // Predicated region
    $region38: #{tpu_custom_call.1} parent=1 // pred_check
      _
    $region39: #{tpu_custom_call.1} parent=1 // pred_check_branch
      %36 = sbr.rel (0) target = $region41
    $region40: #{tpu_custom_call.1} parent=1 // pred_region
      _
    $region41: #{tpu_custom_call.1} parent=1 // pred_fallthru
      _
    // Predicated region
    $region42: #{tpu_custom_call.1} parent=1 // pred_check
      _
    $region43: #{tpu_custom_call.1} parent=1 // pred_check_branch
      %38 = sbr.rel (0) target = $region45
    $region44: #{tpu_custom_call.1} parent=1 // pred_region
      _
    $region45: #{tpu_custom_call.1} parent=1 // pred_fallthru
      _
    %v39 = vld [vmem:[%s0] sm:$0xff]
    %v40 = vld [vmem:[%s0 + $0x8] sm:$0xff]
    %v41 = vld [vmem:[%s0 + $0x10] sm:$0xff]
    %v42 = vld [vmem:[%s0 + $0x18] sm:$0xff]
    %v43 = vld [vmem:[%s0 + $0x20] sm:$0xff]
    %v44 = vld [vmem:[%s0 + $0x28] sm:$0xff]
    %v45 = vld [vmem:[%s2] sm:$0xff]
    %v46 = vld [vmem:[%s2 + $0x8] sm:$0xff]
    %v47 = vld [vmem:[%s2 + $0x10] sm:$0xff]
    %v48 = vld [vmem:[%s2 + $0x18] sm:$0xff]
    %v49 = vld [vmem:[%s2 + $0x20] sm:$0xff]
    %v50 = vld [vmem:[%s2 + $0x28] sm:$0xff]
    %v51 = vld [vmem:[%s2 + $0x30] sm:$0xff]
    %v52 = vld [vmem:[%s2 + $0x38] sm:$0xff]
    %v53 = vld [vmem:[%s2 + $0x40] sm:$0xff]
    %v54 = vld [vmem:[%s2 + $0x48] sm:$0xff]
    %v55 = vld [vmem:[%s2 + $0x50] sm:$0xff]
    %v56 = vld [vmem:[%s2 + $0x58] sm:$0xff]
    %v57 = vld [vmem:[%s2 + $0x60] sm:$0xff]
    %v58 = vld [vmem:[%s2 + $0x68] sm:$0xff]
    %v59 = vld [vmem:[%s2 + $0x70] sm:$0xff]
    %v60 = vld [vmem:[%s2 + $0x78] sm:$0xff]
    %v61 = vld [vmem:[%s2 + $0x80] sm:$0xff]
    %v62 = vld [vmem:[%s2 + $0x88] sm:$0xff]
    %v63 = vld [vmem:[%s2 + $0x90] sm:$0xff]
    %v64 = vld [vmem:[%s2 + $0x98] sm:$0xff]
    %v65 = vld [vmem:[%s2 + $0xa0] sm:$0xff]
    %v66 = vld [vmem:[%s2 + $0xa8] sm:$0xff]
    %v67 = vld [vmem:[%s2 + $0xb0] sm:$0xff]
    %v68 = vld [vmem:[%s2 + $0xb8] sm:$0xff]
    %v69 = vld [vmem:[%s2 + $0xc0] sm:$0xff]
    %v70 = vld [vmem:[%s2 + $0xc8] sm:$0xff]
    %v71 = vld [vmem:[%s2 + $0xd0] sm:$0xff]
    %v72 = vld [vmem:[%s2 + $0xd8] sm:$0xff]
    %v73 = vld [vmem:[%s2 + $0xe0] sm:$0xff]
    %v74 = vld [vmem:[%s2 + $0xe8] sm:$0xff]
    %v75 = vld [vmem:[%s2 + $0xf0] sm:$0xff]
    %v76 = vld [vmem:[%s2 + $0xf8] sm:$0xff]
    %v77 = vld [vmem:[%s2 + $0x100] sm:$0xff]
    %v78 = vld [vmem:[%s2 + $0x108] sm:$0xff]
    %v79 = vld [vmem:[%s2 + $0x110] sm:$0xff]
    %v80 = vld [vmem:[%s2 + $0x118] sm:$0xff]
    %v81 = vld [vmem:[%s2 + $0x120] sm:$0xff]
    %v82 = vld [vmem:[%s2 + $0x128] sm:$0xff]
    %v83 = vld [vmem:[%s2 + $0x130] sm:$0xff]
    %v84 = vld [vmem:[%s2 + $0x138] sm:$0xff]
    %v85 = vld [vmem:[%s2 + $0x140] sm:$0xff]
    %v86 = vld [vmem:[%s2 + $0x148] sm:$0xff]
    %v87 = vld [vmem:[%s2 + $0x150] sm:$0xff]
    %v88 = vld [vmem:[%s2 + $0x158] sm:$0xff]
    %v89 = vld [vmem:[%s2 + $0x160] sm:$0xff]
    %v90 = vld [vmem:[%s2 + $0x168] sm:$0xff]
    %v91 = vld [vmem:[%s2 + $0x170] sm:$0xff]
    %v92 = vld [vmem:[%s2 + $0x178] sm:$0xff]
    %v93 = vld [vmem:[%s2 + $0x180] sm:$0xff]
    %v94 = vld [vmem:[%s2 + $0x188] sm:$0xff]
    %v95 = vld [vmem:[%s2 + $0x190] sm:$0xff]
    %v96 = vld [vmem:[%s2 + $0x198] sm:$0xff]
    %v97 = vld [vmem:[%s2 + $0x1a0] sm:$0xff]
    %v98 = vld [vmem:[%s2 + $0x1a8] sm:$0xff]
    %v99 = vld [vmem:[%s2 + $0x1b0] sm:$0xff]
    %v100 = vld [vmem:[%s2 + $0x1b8] sm:$0xff]
    %v101 = vld [vmem:[%s2 + $0x1c0] sm:$0xff]
    %v102 = vld [vmem:[%s2 + $0x1c8] sm:$0xff]
    %v103 = vld [vmem:[%s2 + $0x1d0] sm:$0xff]
    %v104 = vld [vmem:[%s2 + $0x1d8] sm:$0xff]
    %v105 = vld [vmem:[%s2 + $0x1e0] sm:$0xff]
    %v106 = vld [vmem:[%s2 + $0x1e8] sm:$0xff]
    %v107 = vld [vmem:[%s2 + $0x1f0] sm:$0xff]
    %v108 = vld [vmem:[%s2 + $0x1f8] sm:$0xff]
    %v109 = vld [vmem:[%s2 + $0x200] sm:$0xff]
    %v110 = vld [vmem:[%s2 + $0x208] sm:$0xff]
    %v111 = vld [vmem:[%s2 + $0x210] sm:$0xff]
    %v112 = vld [vmem:[%s2 + $0x218] sm:$0xff]
    %v113 = vld [vmem:[%s2 + $0x220] sm:$0xff]
    %v114 = vld [vmem:[%s2 + $0x228] sm:$0xff]
    %v115 = vld [vmem:[%s2 + $0x230] sm:$0xff]
    %v116 = vld [vmem:[%s2 + $0x238] sm:$0xff]
    %v117 = vld [vmem:[%s2 + $0x240] sm:$0xff]
    %v118 = vld [vmem:[%s2 + $0x248] sm:$0xff]
    %v119 = vld [vmem:[%s2 + $0x250] sm:$0xff]
    %v120 = vld [vmem:[%s2 + $0x258] sm:$0xff]
    %v121 = vld [vmem:[%s2 + $0x260] sm:$0xff]
    %v122 = vld [vmem:[%s2 + $0x268] sm:$0xff]
    %v123 = vld [vmem:[%s2 + $0x270] sm:$0xff]
    %v124 = vld [vmem:[%s2 + $0x278] sm:$0xff]
    %v125 = vld [vmem:[%s2 + $0x280] sm:$0xff]
    %v126 = vld [vmem:[%s2 + $0x288] sm:$0xff]
    %v127 = vld [vmem:[%s2 + $0x290] sm:$0xff]
    %v128 = vld [vmem:[%s2 + $0x298] sm:$0xff]
    %v129 = vld [vmem:[%s2 + $0x2a0] sm:$0xff]
    %v130 = vld [vmem:[%s2 + $0x2a8] sm:$0xff]
    %v131 = vld [vmem:[%s2 + $0x2b0] sm:$0xff]
    %v132 = vld [vmem:[%s2 + $0x2b8] sm:$0xff]
    %v133 = vld [vmem:[%s2 + $0x2c0] sm:$0xff]
    %v134 = vld [vmem:[%s2 + $0x2c8] sm:$0xff]
    %v135 = vld [vmem:[%s2 + $0x2d0] sm:$0xff]
    %v136 = vld [vmem:[%s2 + $0x2d8] sm:$0xff]
    %v137 = vld [vmem:[%s2 + $0x2e0] sm:$0xff]
    %v138 = vld [vmem:[%s2 + $0x2e8] sm:$0xff]
    %v139 = vld [vmem:[%s2 + $0x2f0] sm:$0xff]
    %v140 = vld [vmem:[%s2 + $0x2f8] sm:$0xff]
    %v141 = vld [vmem:[%s3] sm:$0x1]
    %v143 = vlaneseq
    %v144 = vshrl.u32 %v143, 7
    %v145 = vsub.s32 0, %v144
    %v146 = vrot.slane %v141, %v145
    %148 = vmatprep.subr.mxu0 0.0
    %149 = vmatpush1.msra.mxu0 %v45
    %150 = vmatprep.subr.mxu0 0.0
    %151 = vmatpush1.msra.mxu0 %v46
    %152 = vmatprep.subr.mxu0 0.0
    %153 = vmatpush1.msra.mxu0 %v47
    %154 = vmatprep.subr.mxu0 0.0
    %155 = vmatpush1.msra.mxu0 %v48
    %156 = vmatprep.subr.mxu0 0.0
    %157 = vmatpush1.msra.mxu0 %v49
    %158 = vmatprep.subr.mxu0 0.0
    %159 = vmatpush1.msra.mxu0 %v50
    %160 = vmatprep.subr.mxu0 0.0
    %161 = vmatpush1.msra.mxu0 %v51
    %162 = vmatprep.subr.mxu0 0.0
    %163 = vmatpush1.msra.mxu0 %v52
    %164 = vmatprep.subr.mxu0 0.0
    %165 = vmatpush1.msra.mxu0 %v53
    %166 = vmatprep.subr.mxu0 0.0
    %167 = vmatpush1.msra.mxu0 %v54
    %168 = vmatprep.subr.mxu0 0.0
    %169 = vmatpush1.msra.mxu0 %v55
    %170 = vmatprep.subr.mxu0 0.0
    %171 = vmatpush1.msra.mxu0 %v56
    %172 = vmatprep.subr.mxu0 0.0
    %173 = vmatpush1.msra.mxu0 %v57
    %174 = vmatprep.subr.mxu0 0.0
    %175 = vmatpush1.msra.mxu0 %v58
    %176 = vmatprep.subr.mxu0 0.0
    %177 = vmatpush1.msra.mxu0 %v59
    %178 = vmatprep.subr.mxu0 0.0
    %179 = vmatpush1.msra.mxu0 %v60
    %180 = vmatprep.subr.mxu0 0.0
    %181 = vmatpush1.msra.mxu0 %v61
    %182 = vmatprep.subr.mxu0 0.0
    %183 = vmatpush1.msra.mxu0 %v62
    %184 = vmatprep.subr.mxu0 0.0
    %185 = vmatpush1.msra.mxu0 %v63
    %186 = vmatprep.subr.mxu0 0.0
    %187 = vmatpush1.msra.mxu0 %v64
    %188 = vmatprep.subr.mxu0 0.0
    %189 = vmatpush1.msra.mxu0 %v65
    %190 = vmatprep.subr.mxu0 0.0
    %191 = vmatpush1.msra.mxu0 %v66
    %192 = vmatprep.subr.mxu0 0.0
    %193 = vmatpush1.msra.mxu0 %v67
    %194 = vmatprep.subr.mxu0 0.0
    %195 = vmatpush1.msra.mxu0 %v68
    %196 = vmatprep.subr.mxu0 0.0
    %197 = vmatpush1.msra.mxu0 %v69
    %198 = vmatprep.subr.mxu0 0.0
    %199 = vmatpush1.msra.mxu0 %v70
    %200 = vmatprep.subr.mxu0 0.0
    %201 = vmatpush1.msra.mxu0 %v71
    %202 = vmatprep.subr.mxu0 0.0
    %203 = vmatpush1.msra.mxu0 %v72
    %204 = vmatprep.subr.mxu0 0.0
    %205 = vmatpush1.msra.mxu0 %v73
    %206 = vmatprep.subr.mxu0 0.0
    %207 = vmatpush1.msra.mxu0 %v74
    %208 = vmatprep.subr.mxu0 0.0
    %209 = vmatpush1.msra.mxu0 %v75
    %210 = vmatprep.subr.mxu0 0.0
    %211 = vmatpush1.msra.mxu0 %v76
    %212 = vmatprep.mubr.f32.mxu0 %v40
    %213 = vmatmul.mubr.f32.gmra.mrb[0].mxu0 %v39
    %v214 = vpop.f32.mrb[0].mxu0
    %v215 = vadd.f32 %v146, %v214
    %v216 = vpop.f32.mrb[0].mxu0
    %217 = vdwg.mxu0
    %218 = vmatprep.subr.mxu0 0.0
    %219 = vmatpush1.msra.mxu0 %v77
    %220 = vmatprep.subr.mxu0 0.0
    %221 = vmatpush1.msra.mxu0 %v78
    %222 = vmatprep.subr.mxu0 0.0
    %223 = vmatpush1.msra.mxu0 %v79
    %224 = vmatprep.subr.mxu0 0.0
    %225 = vmatpush1.msra.mxu0 %v80
    %226 = vmatprep.subr.mxu0 0.0
    %227 = vmatpush1.msra.mxu0 %v81
    %228 = vmatprep.subr.mxu0 0.0
    %229 = vmatpush1.msra.mxu0 %v82
    %230 = vmatprep.subr.mxu0 0.0
    %231 = vmatpush1.msra.mxu0 %v83
    %232 = vmatprep.subr.mxu0 0.0
    %233 = vmatpush1.msra.mxu0 %v84
    %234 = vmatprep.subr.mxu0 0.0
    %235 = vmatpush1.msra.mxu0 %v85
    %236 = vmatprep.subr.mxu0 0.0
    %237 = vmatpush1.msra.mxu0 %v86
    %238 = vmatprep.subr.mxu0 0.0
    %239 = vmatpush1.msra.mxu0 %v87
    %240 = vmatprep.subr.mxu0 0.0
    %241 = vmatpush1.msra.mxu0 %v88
    %242 = vmatprep.subr.mxu0 0.0
    %243 = vmatpush1.msra.mxu0 %v89
    %244 = vmatprep.subr.mxu0 0.0
    %245 = vmatpush1.msra.mxu0 %v90
    %246 = vmatprep.subr.mxu0 0.0
    %247 = vmatpush1.msra.mxu0 %v91
    %248 = vmatprep.subr.mxu0 0.0
    %249 = vmatpush1.msra.mxu0 %v92
    %250 = vmatprep.subr.mxu0 0.0
    %251 = vmatpush1.msra.mxu0 %v93
    %252 = vmatprep.subr.mxu0 0.0
    %253 = vmatpush1.msra.mxu0 %v94
    %254 = vmatprep.subr.mxu0 0.0
    %255 = vmatpush1.msra.mxu0 %v95
    %256 = vmatprep.subr.mxu0 0.0
    %257 = vmatpush1.msra.mxu0 %v96
    %258 = vmatprep.subr.mxu0 0.0
    %259 = vmatpush1.msra.mxu0 %v97
    %260 = vmatprep.subr.mxu0 0.0
    %261 = vmatpush1.msra.mxu0 %v98
    %262 = vmatprep.subr.mxu0 0.0
    %263 = vmatpush1.msra.mxu0 %v99
    %264 = vmatprep.subr.mxu0 0.0
    %265 = vmatpush1.msra.mxu0 %v100
    %266 = vmatprep.subr.mxu0 0.0
    %267 = vmatpush1.msra.mxu0 %v101
    %268 = vmatprep.subr.mxu0 0.0
    %269 = vmatpush1.msra.mxu0 %v102
    %270 = vmatprep.subr.mxu0 0.0
    %271 = vmatpush1.msra.mxu0 %v103
    %272 = vmatprep.subr.mxu0 0.0
    %273 = vmatpush1.msra.mxu0 %v104
    %274 = vmatprep.subr.mxu0 0.0
    %275 = vmatpush1.msra.mxu0 %v105
    %276 = vmatprep.subr.mxu0 0.0
    %277 = vmatpush1.msra.mxu0 %v106
    %278 = vmatprep.subr.mxu0 0.0
    %279 = vmatpush1.msra.mxu0 %v107
    %280 = vmatprep.subr.mxu0 0.0
    %281 = vmatpush1.msra.mxu0 %v108
    %282 = vmatprep.mubr.f32.mxu0 %v42
    %283 = vmatmul.mubr.f32.gmra.mrb[0].mxu0 %v41
    %v284 = vpop.f32.mrb[0].mxu0
    %v285 = vadd.f32 %v215, %v284
    %v286 = vpop.f32.mrb[0].mxu0
    %287 = vdwg.mxu0
    %288 = vmatprep.subr.mxu0 0.0
    %289 = vmatpush1.msra.mxu0 %v109
    %290 = vmatprep.subr.mxu0 0.0
    %291 = vmatpush1.msra.mxu0 %v110
    %292 = vmatprep.subr.mxu0 0.0
    %293 = vmatpush1.msra.mxu0 %v111
    %294 = vmatprep.subr.mxu0 0.0
    %295 = vmatpush1.msra.mxu0 %v112
    %296 = vmatprep.subr.mxu0 0.0
    %297 = vmatpush1.msra.mxu0 %v113
    %298 = vmatprep.subr.mxu0 0.0
    %299 = vmatpush1.msra.mxu0 %v114
    %300 = vmatprep.subr.mxu0 0.0
    %301 = vmatpush1.msra.mxu0 %v115
    %302 = vmatprep.subr.mxu0 0.0
    %303 = vmatpush1.msra.mxu0 %v116
    %304 = vmatprep.subr.mxu0 0.0
    %305 = vmatpush1.msra.mxu0 %v117
    %306 = vmatprep.subr.mxu0 0.0
    %307 = vmatpush1.msra.mxu0 %v118
    %308 = vmatprep.subr.mxu0 0.0
    %309 = vmatpush1.msra.mxu0 %v119
    %310 = vmatprep.subr.mxu0 0.0
    %311 = vmatpush1.msra.mxu0 %v120
    %312 = vmatprep.subr.mxu0 0.0
    %313 = vmatpush1.msra.mxu0 %v121
    %314 = vmatprep.subr.mxu0 0.0
    %315 = vmatpush1.msra.mxu0 %v122
    %316 = vmatprep.subr.mxu0 0.0
    %317 = vmatpush1.msra.mxu0 %v123
    %318 = vmatprep.subr.mxu0 0.0
    %319 = vmatpush1.msra.mxu0 %v124
    %320 = vmatprep.subr.mxu0 0.0
    %321 = vmatpush1.msra.mxu0 %v125
    %322 = vmatprep.subr.mxu0 0.0
    %323 = vmatpush1.msra.mxu0 %v126
    %324 = vmatprep.subr.mxu0 0.0
    %325 = vmatpush1.msra.mxu0 %v127
    %326 = vmatprep.subr.mxu0 0.0
    %327 = vmatpush1.msra.mxu0 %v128
    %328 = vmatprep.subr.mxu0 0.0
    %329 = vmatpush1.msra.mxu0 %v129
    %330 = vmatprep.subr.mxu0 0.0
    %331 = vmatpush1.msra.mxu0 %v130
    %332 = vmatprep.subr.mxu0 0.0
    %333 = vmatpush1.msra.mxu0 %v131
    %334 = vmatprep.subr.mxu0 0.0
    %335 = vmatpush1.msra.mxu0 %v132
    %336 = vmatprep.subr.mxu0 0.0
    %337 = vmatpush1.msra.mxu0 %v133
    %338 = vmatprep.subr.mxu0 0.0
    %339 = vmatpush1.msra.mxu0 %v134
    %340 = vmatprep.subr.mxu0 0.0
    %341 = vmatpush1.msra.mxu0 %v135
    %342 = vmatprep.subr.mxu0 0.0
    %343 = vmatpush1.msra.mxu0 %v136
    %344 = vmatprep.subr.mxu0 0.0
    %345 = vmatpush1.msra.mxu0 %v137
    %346 = vmatprep.subr.mxu0 0.0
    %347 = vmatpush1.msra.mxu0 %v138
    %348 = vmatprep.subr.mxu0 0.0
    %349 = vmatpush1.msra.mxu0 %v139
    %350 = vmatprep.subr.mxu0 0.0
    %351 = vmatpush1.msra.mxu0 %v140
    %352 = vmatprep.mubr.f32.mxu0 %v44
    %353 = vmatmul.mubr.f32.gmra.mrb[0].mxu0 %v43
    %v354 = vpop.f32.mrb[0].mxu0
    %v355 = vadd.f32 %v285, %v354
    %v356 = vpop.f32.mrb[0].mxu0
    %357 = vdwg.mxu0
    %v358 = vmax.f32 %v355, 0.0
    %v359 = vand.u32 2147483647, %v355
    %v360 = vsub.f32 0.0, %v359
    %v361 = vmul.f32 %v360, 1.442695
    %v362 = vpow.pop %v361
    %v363 = vadd.f32 %v362, 1.0
    %v364 = vlog2.pop %v363
    %v365 = vmul.f32 %v364, 0.6931472
    %v366 = vmul.f32 -0.5, %v362
    %v367 = vadd.f32 %v366, 1.0
    %v368 = vmul.f32 %v367, %v362
    %v369 = vand.u32 2147483647, %v362
    %vm370 = vcmp.lt.f32.partialorder %v369, 0.0004427343
    %v371 = vsel %vm370, %v368, %v365
    %v372 = vadd.f32 %v358, %v371
    %v373 = vld [vmem:[%s4] sm:$0xff]
    %v374 = vld [vmem:[%s4 + $0x8] sm:$0xff]
    %v375 = vld [vmem:[%s4 + $0x10] sm:$0xff]
    %v376 = vld [vmem:[%s4 + $0x18] sm:$0xff]
    %v377 = vld [vmem:[%s4 + $0x20] sm:$0xff]
    %v378 = vld [vmem:[%s4 + $0x28] sm:$0xff]
    %v379 = vld [vmem:[%s4 + $0x30] sm:$0xff]
    %v380 = vld [vmem:[%s4 + $0x38] sm:$0xff]
    %v381 = vld [vmem:[%s5] sm:$0x1]
    %v383 = vlaneseq
    %v384 = vshrl.u32 %v383, 7
    %v385 = vsub.s32 0, %v384
    %v386 = vrot.slane %v381, %v385
    %vm388 = vcmask 523264
    %v390 = vsel %vm388, %v372, 0
    %392 = vmatprep.subr.mxu0 0.0
    %393 = vmatpush1.msra.mxu0 %v373
    %394 = vmatprep.subr.mxu0 0.0
    %395 = vmatpush1.msra.mxu0 %v374
    %396 = vmatprep.subr.mxu0 0.0
    %397 = vmatpush1.msra.mxu0 %v375
    %398 = vmatprep.subr.mxu0 0.0
    %399 = vmatpush1.msra.mxu0 %v376
    %400 = vmatprep.subr.mxu0 0.0
    %401 = vmatpush1.msra.mxu0 %v377
    %402 = vmatprep.subr.mxu0 0.0
    %403 = vmatpush1.msra.mxu0 %v378
    %404 = vmatprep.subr.mxu0 0.0
    %405 = vmatpush1.msra.mxu0 %v379
    %406 = vmatprep.subr.mxu0 0.0
    %407 = vmatpush1.msra.mxu0 %v380
    %408 = vmatprep.subr.mxu0 0.0
    %409 = vmatpush1.msra.mxu0 0.0
    %410 = vmatprep.subr.mxu0 0.0
    %411 = vmatpush1.msra.mxu0 0.0
    %412 = vmatprep.subr.mxu0 0.0
    %413 = vmatpush1.msra.mxu0 0.0
    %414 = vmatprep.subr.mxu0 0.0
    %415 = vmatpush1.msra.mxu0 0.0
    %416 = vmatprep.subr.mxu0 0.0
    %417 = vmatpush1.msra.mxu0 0.0
    %418 = vmatprep.subr.mxu0 0.0
    %419 = vmatpush1.msra.mxu0 0.0
    %420 = vmatprep.subr.mxu0 0.0
    %421 = vmatpush1.msra.mxu0 0.0
    %422 = vmatprep.subr.mxu0 0.0
    %423 = vmatpush1.msra.mxu0 0.0
    %424 = vmatprep.subr.mxu0 0.0
    %425 = vmatpush1.msra.mxu0 0.0
    %426 = vmatprep.subr.mxu0 0.0
    %427 = vmatpush1.msra.mxu0 0.0
    %428 = vmatprep.subr.mxu0 0.0
    %429 = vmatpush1.msra.mxu0 0.0
    %430 = vmatprep.subr.mxu0 0.0
    %431 = vmatpush1.msra.mxu0 0.0
    %432 = vmatprep.subr.mxu0 0.0
    %433 = vmatpush1.msra.mxu0 0.0
    %434 = vmatprep.subr.mxu0 0.0
    %435 = vmatpush1.msra.mxu0 0.0
    %436 = vmatprep.subr.mxu0 0.0
    %437 = vmatpush1.msra.mxu0 0.0
    %438 = vmatprep.subr.mxu0 0.0
    %439 = vmatpush1.msra.mxu0 0.0
    %440 = vmatprep.subr.mxu0 0.0
    %441 = vmatpush1.msra.mxu0 0.0
    %442 = vmatprep.subr.mxu0 0.0
    %443 = vmatpush1.msra.mxu0 0.0
    %444 = vmatprep.subr.mxu0 0.0
    %445 = vmatpush1.msra.mxu0 0.0
    %446 = vmatprep.subr.mxu0 0.0
    %447 = vmatpush1.msra.mxu0 0.0
    %448 = vmatprep.subr.mxu0 0.0
    %449 = vmatpush1.msra.mxu0 0.0
    %450 = vmatprep.subr.mxu0 0.0
    %451 = vmatpush1.msra.mxu0 0.0
    %452 = vmatprep.subr.mxu0 0.0
    %453 = vmatpush1.msra.mxu0 0.0
    %454 = vmatprep.subr.mxu0 0.0
    %455 = vmatpush1.msra.mxu0 0.0
    %456 = vmatprep.mubr.f32.mxu0 0.0
    %457 = vmatmul.mubr.f32.gmra.mrb[0].mxu0 %v390
    %v458 = vpop.f32.mrb[0].mxu0
    %v459 = vadd.f32 %v386, %v458
    %v460 = vpop.f32.mrb[0].mxu0
    %461 = vdwg.mxu0
    %v462 = vmax.f32 %v459, 0.0
    %v463 = vand.u32 2147483647, %v459
    %v464 = vsub.f32 0.0, %v463
    %v465 = vmul.f32 %v464, 1.442695
    %v466 = vpow.pop %v465
    %v467 = vadd.f32 %v466, 1.0
    %v468 = vlog2.pop %v467
    %v469 = vmul.f32 %v468, 0.6931472
    %v470 = vmul.f32 -0.5, %v466
    %v471 = vadd.f32 %v470, 1.0
    %v472 = vmul.f32 %v471, %v466
    %v473 = vand.u32 2147483647, %v466
    %vm474 = vcmp.lt.f32.partialorder %v473, 0.0004427343
    %v475 = vsel %vm474, %v472, %v469
    %v476 = vadd.f32 %v462, %v475
    %v477 = vld [vmem:[%s6] sm:$0xff]
    %v478 = vld [vmem:[%s6 + $0x8] sm:$0xff]
    %v479 = vld [vmem:[%s6 + $0x10] sm:$0xff]
    %v480 = vld [vmem:[%s6 + $0x18] sm:$0xff]
    %v481 = vld [vmem:[%s6 + $0x20] sm:$0xff]
    %v482 = vld [vmem:[%s6 + $0x28] sm:$0xff]
    %v483 = vld [vmem:[%s6 + $0x30] sm:$0xff]
    %v484 = vld [vmem:[%s6 + $0x38] sm:$0xff]
    %v485 = vld [vmem:[%s7] sm:$0x1]
    %v487 = vlaneseq
    %v488 = vshrl.u32 %v487, 7
    %v489 = vsub.s32 0, %v488
    %v490 = vrot.slane %v485, %v489
    %v493 = vsel %vm388, %v476, 0
    %495 = vmatprep.subr.mxu0 0.0
    %496 = vmatpush1.msra.mxu0 %v477
    %497 = vmatprep.subr.mxu0 0.0
    %498 = vmatpush1.msra.mxu0 %v478
    %499 = vmatprep.subr.mxu0 0.0
    %500 = vmatpush1.msra.mxu0 %v479
    %501 = vmatprep.subr.mxu0 0.0
    %502 = vmatpush1.msra.mxu0 %v480
    %503 = vmatprep.subr.mxu0 0.0
    %504 = vmatpush1.msra.mxu0 %v481
    %505 = vmatprep.subr.mxu0 0.0
    %506 = vmatpush1.msra.mxu0 %v482
    %507 = vmatprep.subr.mxu0 0.0
    %508 = vmatpush1.msra.mxu0 %v483
    %509 = vmatprep.subr.mxu0 0.0
    %510 = vmatpush1.msra.mxu0 %v484
    %511 = vmatprep.subr.mxu0 0.0
    %512 = vmatpush1.msra.mxu0 0.0
    %513 = vmatprep.subr.mxu0 0.0
    %514 = vmatpush1.msra.mxu0 0.0
    %515 = vmatprep.subr.mxu0 0.0
    %516 = vmatpush1.msra.mxu0 0.0
    %517 = vmatprep.subr.mxu0 0.0
    %518 = vmatpush1.msra.mxu0 0.0
    %519 = vmatprep.subr.mxu0 0.0
    %520 = vmatpush1.msra.mxu0 0.0
    %521 = vmatprep.subr.mxu0 0.0
    %522 = vmatpush1.msra.mxu0 0.0
    %523 = vmatprep.subr.mxu0 0.0
    %524 = vmatpush1.msra.mxu0 0.0
    %525 = vmatprep.subr.mxu0 0.0
    %526 = vmatpush1.msra.mxu0 0.0
    %527 = vmatprep.subr.mxu0 0.0
    %528 = vmatpush1.msra.mxu0 0.0
    %529 = vmatprep.subr.mxu0 0.0
    %530 = vmatpush1.msra.mxu0 0.0
    %531 = vmatprep.subr.mxu0 0.0
    %532 = vmatpush1.msra.mxu0 0.0
    %533 = vmatprep.subr.mxu0 0.0
    %534 = vmatpush1.msra.mxu0 0.0
    %535 = vmatprep.subr.mxu0 0.0
    %536 = vmatpush1.msra.mxu0 0.0
    %537 = vmatprep.subr.mxu0 0.0
    %538 = vmatpush1.msra.mxu0 0.0
    %539 = vmatprep.subr.mxu0 0.0
    %540 = vmatpush1.msra.mxu0 0.0
    %541 = vmatprep.subr.mxu0 0.0
    %542 = vmatpush1.msra.mxu0 0.0
    %543 = vmatprep.subr.mxu0 0.0
    %544 = vmatpush1.msra.mxu0 0.0
    %545 = vmatprep.subr.mxu0 0.0
    %546 = vmatpush1.msra.mxu0 0.0
    %547 = vmatprep.subr.mxu0 0.0
    %548 = vmatpush1.msra.mxu0 0.0
    %549 = vmatprep.subr.mxu0 0.0
    %550 = vmatpush1.msra.mxu0 0.0
    %551 = vmatprep.subr.mxu0 0.0
    %552 = vmatpush1.msra.mxu0 0.0
    %553 = vmatprep.subr.mxu0 0.0
    %554 = vmatpush1.msra.mxu0 0.0
    %555 = vmatprep.subr.mxu0 0.0
    %556 = vmatpush1.msra.mxu0 0.0
    %557 = vmatprep.subr.mxu0 0.0
    %558 = vmatpush1.msra.mxu0 0.0
    %559 = vmatprep.mubr.f32.mxu0 0.0
    %560 = vmatmul.mubr.f32.gmra.mrb[0].mxu0 %v493
    %v561 = vpop.f32.mrb[0].mxu0
    %v562 = vadd.f32 %v490, %v561
    %v563 = vpop.f32.mrb[0].mxu0
    %564 = vdwg.mxu0
    %v565 = vld [vmem:[%s8] sm:$0xff]
    %v566 = vld [vmem:[%s8 + $0x8] sm:$0xff]
    %v567 = vld [vmem:[%s8 + $0x10] sm:$0xff]
    %v568 = vld [vmem:[%s8 + $0x18] sm:$0xff]
    %v569 = vld [vmem:[%s8 + $0x20] sm:$0xff]
    %v570 = vld [vmem:[%s8 + $0x28] sm:$0xff]
    %v571 = vld [vmem:[%s8 + $0x30] sm:$0xff]
    %v572 = vld [vmem:[%s8 + $0x38] sm:$0xff]
    %v573 = vld [vmem:[%s9] sm:$0x1]
    %v575 = vlaneseq
    %v576 = vshrl.u32 %v575, 7
    %v577 = vsub.s32 0, %v576
    %v578 = vrot.slane %v573, %v577
    %580 = vmatprep.subr.mxu0 0.0
    %581 = vmatpush1.msra.mxu0 %v565
    %582 = vmatprep.subr.mxu0 0.0
    %583 = vmatpush1.msra.mxu0 %v566
    %584 = vmatprep.subr.mxu0 0.0
    %585 = vmatpush1.msra.mxu0 %v567
    %586 = vmatprep.subr.mxu0 0.0
    %587 = vmatpush1.msra.mxu0 %v568
    %588 = vmatprep.subr.mxu0 0.0
    %589 = vmatpush1.msra.mxu0 %v569
    %590 = vmatprep.subr.mxu0 0.0
    %591 = vmatpush1.msra.mxu0 %v570
    %592 = vmatprep.subr.mxu0 0.0
    %593 = vmatpush1.msra.mxu0 %v571
    %594 = vmatprep.subr.mxu0 0.0
    %595 = vmatpush1.msra.mxu0 %v572
    %596 = vmatprep.subr.mxu0 0.0
    %597 = vmatpush1.msra.mxu0 0.0
    %598 = vmatprep.subr.mxu0 0.0
    %599 = vmatpush1.msra.mxu0 0.0
    %600 = vmatprep.subr.mxu0 0.0
    %601 = vmatpush1.msra.mxu0 0.0
    %602 = vmatprep.subr.mxu0 0.0
    %603 = vmatpush1.msra.mxu0 0.0
    %604 = vmatprep.subr.mxu0 0.0
    %605 = vmatpush1.msra.mxu0 0.0
    %606 = vmatprep.subr.mxu0 0.0
    %607 = vmatpush1.msra.mxu0 0.0
    %608 = vmatprep.subr.mxu0 0.0
    %609 = vmatpush1.msra.mxu0 0.0
    %610 = vmatprep.subr.mxu0 0.0
    %611 = vmatpush1.msra.mxu0 0.0
    %612 = vmatprep.subr.mxu0 0.0
    %613 = vmatpush1.msra.mxu0 0.0
    %614 = vmatprep.subr.mxu0 0.0
    %615 = vmatpush1.msra.mxu0 0.0
    %616 = vmatprep.subr.mxu0 0.0
    %617 = vmatpush1.msra.mxu0 0.0
    %618 = vmatprep.subr.mxu0 0.0
    %619 = vmatpush1.msra.mxu0 0.0
    %620 = vmatprep.subr.mxu0 0.0
    %621 = vmatpush1.msra.mxu0 0.0
    %622 = vmatprep.subr.mxu0 0.0
    %623 = vmatpush1.msra.mxu0 0.0
    %624 = vmatprep.subr.mxu0 0.0
    %625 = vmatpush1.msra.mxu0 0.0
    %626 = vmatprep.subr.mxu0 0.0
    %627 = vmatpush1.msra.mxu0 0.0
    %628 = vmatprep.subr.mxu0 0.0
    %629 = vmatpush1.msra.mxu0 0.0
    %630 = vmatprep.subr.mxu0 0.0
    %631 = vmatpush1.msra.mxu0 0.0
    %632 = vmatprep.subr.mxu0 0.0
    %633 = vmatpush1.msra.mxu0 0.0
    %634 = vmatprep.subr.mxu0 0.0
    %635 = vmatpush1.msra.mxu0 0.0
    %636 = vmatprep.subr.mxu0 0.0
    %637 = vmatpush1.msra.mxu0 0.0
    %638 = vmatprep.subr.mxu0 0.0
    %639 = vmatpush1.msra.mxu0 0.0
    %640 = vmatprep.subr.mxu0 0.0
    %641 = vmatpush1.msra.mxu0 0.0
    %642 = vmatprep.subr.mxu0 0.0
    %643 = vmatpush1.msra.mxu0 0.0
    %644 = vmatprep.mubr.f32.mxu0 0.0
    %645 = vmatmul.mubr.f32.gmra.mrb[0].mxu0 %v493
    %v646 = vpop.f32.mrb[0].mxu0
    %v647 = vadd.f32 %v578, %v646
    %v648 = vpop.f32.mrb[0].mxu0
    %649 = vdwg.mxu0
    %v650 = vld [vmem:[%s1] sm:$0xff]
    %v651 = vmul.f32 %v647, 0.5
    %v652 = vmul.f32 %v651, 1.442695
    %v653 = vpow.pop %v652
    %v654 = vmul.f32 %v650, %v653
    %v655 = vadd.f32 %v562, %v654
    %vm656 = vcmask 130048
    %v657 = vsel %vm656, %v655, -inf
    %658 = vmax.xlane.f32.xlu0 %v657
    %v659 = vpop.xlane.xlu0 %658
    %v660 = vsub.f32 %v655, %v659
    %v661 = vmul.f32 %v660, 1.442695
    %v662 = vpow.pop %v661
    %v663 = vsel %vm656, %v662, 0.0
    %664 = vadd.xlane.f32.xlu0 %v663
    %v665 = vpop.xlane.xlu0 %664
    %v666 = vrcp.pop %v665
    %v667 = vmul.f32 %v662, %v666
    %v668 = vld [vmem:[%s10] sm:$0xff]
    %v669 = vld [vmem:[%s10 + $0x8] sm:$0xff]
    %v671 = vsel %vm656, %v667, 0
    %673 = vmatprep.subr.mxu0 0.0
    %674 = vmatpush1.msra.mxu0 %v668
    %675 = vmatprep.subr.mxu0 0.0
    %676 = vmatpush1.msra.mxu0 %v669
    %677 = vmatprep.subr.mxu0 0.0
    %678 = vmatpush1.msra.mxu0 0.0
    %679 = vmatprep.subr.mxu0 0.0
    %680 = vmatpush1.msra.mxu0 0.0
    %681 = vmatprep.subr.mxu0 0.0
    %682 = vmatpush1.msra.mxu0 0.0
    %683 = vmatprep.subr.mxu0 0.0
    %684 = vmatpush1.msra.mxu0 0.0
    %685 = vmatprep.subr.mxu0 0.0
    %686 = vmatpush1.msra.mxu0 0.0
    %687 = vmatprep.subr.mxu0 0.0
    %688 = vmatpush1.msra.mxu0 0.0
    %689 = vmatprep.subr.mxu0 0.0
    %690 = vmatpush1.msra.mxu0 0.0
    %691 = vmatprep.subr.mxu0 0.0
    %692 = vmatpush1.msra.mxu0 0.0
    %693 = vmatprep.subr.mxu0 0.0
    %694 = vmatpush1.msra.mxu0 0.0
    %695 = vmatprep.subr.mxu0 0.0
    %696 = vmatpush1.msra.mxu0 0.0
    %697 = vmatprep.subr.mxu0 0.0
    %698 = vmatpush1.msra.mxu0 0.0
    %699 = vmatprep.subr.mxu0 0.0
    %700 = vmatpush1.msra.mxu0 0.0
    %701 = vmatprep.subr.mxu0 0.0
    %702 = vmatpush1.msra.mxu0 0.0
    %703 = vmatprep.subr.mxu0 0.0
    %704 = vmatpush1.msra.mxu0 0.0
    %705 = vmatprep.subr.mxu0 0.0
    %706 = vmatpush1.msra.mxu0 0.0
    %707 = vmatprep.subr.mxu0 0.0
    %708 = vmatpush1.msra.mxu0 0.0
    %709 = vmatprep.subr.mxu0 0.0
    %710 = vmatpush1.msra.mxu0 0.0
    %711 = vmatprep.subr.mxu0 0.0
    %712 = vmatpush1.msra.mxu0 0.0
    %713 = vmatprep.subr.mxu0 0.0
    %714 = vmatpush1.msra.mxu0 0.0
    %715 = vmatprep.subr.mxu0 0.0
    %716 = vmatpush1.msra.mxu0 0.0
    %717 = vmatprep.subr.mxu0 0.0
    %718 = vmatpush1.msra.mxu0 0.0
    %719 = vmatprep.subr.mxu0 0.0
    %720 = vmatpush1.msra.mxu0 0.0
    %721 = vmatprep.subr.mxu0 0.0
    %722 = vmatpush1.msra.mxu0 0.0
    %723 = vmatprep.subr.mxu0 0.0
    %724 = vmatpush1.msra.mxu0 0.0
    %725 = vmatprep.subr.mxu0 0.0
    %726 = vmatpush1.msra.mxu0 0.0
    %727 = vmatprep.subr.mxu0 0.0
    %728 = vmatpush1.msra.mxu0 0.0
    %729 = vmatprep.subr.mxu0 0.0
    %730 = vmatpush1.msra.mxu0 0.0
    %731 = vmatprep.subr.mxu0 0.0
    %732 = vmatpush1.msra.mxu0 0.0
    %733 = vmatprep.subr.mxu0 0.0
    %734 = vmatpush1.msra.mxu0 0.0
    %735 = vmatprep.subr.mxu0 0.0
    %736 = vmatpush1.msra.mxu0 0.0
    %737 = vmatprep.mubr.f32.mxu0 0.0
    %738 = vmatmul.mubr.f32.gmra.mrb[0].mxu0 %v671
    %v739 = vpop.f32.mrb[0].mxu0
    %v740 = vadd.f32 0.0, %v739
    %v741 = vpop.f32.mrb[0].mxu0
    %742 = vdwg.mxu0
    %v743 = vand.u32 2147483647, %v740
    %v744 = vsub.f32 0.0, %v743
    %v745 = vmul.f32 %v744, 1.442695
    %v746 = vpow.pop %v745
    %v747 = vadd.f32 %v746, 1.0
    %v748 = vrcp.pop %v747
    %vm749 = vcmp.ge.f32.partialorder %v740, 0.0
    %v750 = vmul.f32 %v746, %v748
    %v751 = vsel %vm749, %v748, %v750
    %v752 = vpack.c.bf16 %v751, %v751
    %753 = vst [vmem:[#allocation2] sm:$0xf] %v752
    %v754 = vpack.c.bf16 %v39, %v39
    %v755 = vpack.c.bf16 %v40, %v40
    %v756 = vpack.c.bf16 %v41, %v41
    %v757 = vpack.c.bf16 %v42, %v42
    %v758 = vpack.c.bf16 %v43, %v43
    %v759 = vpack.c.bf16 %v44, %v44
    %v766 = vunpack.c.l.b16 %v754
    %v767 = vunpack.c.l.b16 %v755
    %v768 = vunpack.c.l.b16 %v756
    %v769 = vunpack.c.l.b16 %v757
    %v770 = vunpack.c.l.b16 %v758
    %v771 = vunpack.c.l.b16 %v759
    %v772 = vpack.c.b16 %v767, %v766
    %v773 = vpack.c.b16 %v769, %v768
    %v774 = vpack.c.b16 %v771, %v770
    %778 = vst [vmem:[#allocation2 + $0x4] sm:$0xff] %v772
    %779 = vst [vmem:[#allocation2 + $0xc] sm:$0xff] %v773
    %780 = vst [vmem:[#allocation2 + $0x14] sm:$0xff] %v774
    // Predicated region
    $region46: #{tpu_custom_call.1} parent=1 // pred_check
      _
    $region47: #{tpu_custom_call.1} parent=1 // pred_check_branch
      %782 = sbr.rel (0) target = $region49
    $region48: #{tpu_custom_call.1} parent=1 // pred_region
      %s784 = ssub.s32 448, 448
      %785 = vsyncadd [#allocation3], %s784
      %s787 = sshll.u32 [#allocation2], 4
      %s788 = int_to_ptr.vmem [resolvable:$true] %s787
      %790 = dma.vmem_to_hbm [thread:$0]  %s788, 448, %s11, [#allocation3]
    $region49: #{tpu_custom_call.1} parent=1 // pred_fallthru
      _
    // Predicated region
    $region50: #{tpu_custom_call.1} parent=1 // pred_check
      _
    $region51: #{tpu_custom_call.1} parent=1 // pred_check_branch
      %792 = sbr.rel (0) target = $region53
    $region52: #{tpu_custom_call.1} parent=1 // pred_region
      %793 = dma.done [#allocation3], 448
    $region53: #{tpu_custom_call.1} parent=1 // pred_fallthru
      _
    %794 = vsyncpa [#allocation3], 1

</llo_original>
